<compile_context>
chip_gen: v7x
topology: tpu7x:2x2x1
jax: 0.10.0
libtpu: 0.0.40
codegen_flags: <defaults>
</compile_context>

<pallas_src>
import numpy as np
import jax
import jax.numpy as jnp
from jax.experimental import pallas as pl
from jax.experimental.pallas import tpu as pltpu


# ----------------------------------------------------------------------------
# Pallas kernel: the forward hot path  out_tile = x_tile @ P
# ----------------------------------------------------------------------------
def _metadiag_forward_kernel(x_ref, p_ref, o_ref):
    o_ref[...] = jnp.dot(
        x_ref[...], p_ref[...], preferred_element_type=jnp.float32
    ).astype(o_ref.dtype)


def _round_up(v, m):
    return ((v + m - 1) // m) * m


def metadiag_forward(x, P, *, tile_n=512, compute_dtype=None):
    """Forward pass of MetaDiag: x @ P, computed in a Pallas TPU kernel.

    x: (N, D) activations.  P: (D, K) projection buffer from fit().
    compute_dtype: optionally cast operands (e.g. jnp.bfloat16) for the MXU;
                   accumulation is always f32 and the output keeps x.dtype.
    """
    N, D = x.shape
    D2, K = P.shape
    assert D == D2, f"feature dim mismatch: {D} vs {D2}"
    out_dtype = x.dtype

    if compute_dtype is not None:
        x = x.astype(compute_dtype)
        P = P.astype(compute_dtype)
    elem = jnp.dtype(x.dtype).itemsize

    # --- Lane-dense output: pad K up to a multiple of 128 lanes. -------------
    K_pad = _round_up(max(K, 1), 128)
    if K_pad != K:
        P = jnp.pad(P, ((0, 0), (0, K_pad - K)))

    # --- Tile the N axis. ----------------------------------------------------
    # VMEM budget for double-buffered x & out tiles; P is resident on top.
    # 8 MiB keeps us comfortably inside v5e's 16 MiB scoped default and v7x's
    # smaller (64 MiB physical) VMEM.
    budget_bytes = 8 * 1024 * 1024
    rows_fit = max(8, budget_bytes // (2 * (D + K_pad) * elem))
    n_round = max(8, _round_up(N, 8))          # don't over-pad tiny batches
    tile_n = int(max(8, min(tile_n, n_round, (rows_fit // 8) * 8)))

    n_tiles = pl.cdiv(N, tile_n)
    N_pad = n_tiles * tile_n
    if N_pad != N:
        x = jnp.pad(x, ((0, N_pad - N), (0, 0)))

    # Advisory cost estimate for XLA scheduling around this small call.
    flops = 2 * N_pad * D * K_pad
    bytes_accessed = (
        (N_pad * D + D * K_pad) * elem
        + N_pad * K_pad * jnp.dtype(out_dtype).itemsize
    )
    cost = pl.CostEstimate(
        flops=int(flops), transcendentals=0, bytes_accessed=int(bytes_accessed)
    )

    # Only raise the scoped-VMEM limit if the working set actually needs it.
    vmem_est = (2 * tile_n * (D + K_pad) + 2 * D * K_pad) * elem
    vmem_limit = None
    if 2 * vmem_est > 16 * 1024 * 1024:
        vmem_limit = int(min(2 * vmem_est, 96 * 1024 * 1024))

    compiler_params = pltpu.CompilerParams(
        # "parallel": lets v7x shard row-tiles across its 2 TensorCores;
        # harmless on single-TC v5e / v6e.
        dimension_semantics=("parallel",),
        vmem_limit_bytes=vmem_limit,
    )

    out = pl.pallas_call(
        _metadiag_forward_kernel,
        out_shape=jax.ShapeDtypeStruct((N_pad, K_pad), out_dtype),
        grid=(n_tiles,),
        in_specs=[
            pl.BlockSpec((tile_n, D), lambda i: (i, 0)),     # x: tiled along N
            pl.BlockSpec((D, K_pad), lambda i: (0, 0)),      # P: VMEM-resident
        ],
        out_specs=pl.BlockSpec((tile_n, K_pad), lambda i: (i, 0)),
        compiler_params=compiler_params,
        cost_estimate=cost,
    )(x, P)

    # Slice padded rows / columns back off.
    return out[:N, :K]


# ----------------------------------------------------------------------------
# Deterministic parameter setup (mirrors MetaDiag.fit with project=True,
# quotient_mode='product', connectivity='fully_self_connected').
# This is glue / init code, done in plain numpy+JAX, not the kernel.
# ----------------------------------------------------------------------------
def _cross_cov(Y, X):
    # Mirrors the module's cross_cov (normalizes by N*(N-1)).
    N = X.shape[0]
    Yd = Y - Y.mean(axis=0, keepdims=True)
    Xd = X - X.mean(axis=0, keepdims=True)
    return Yd.T @ Xd / (N * (N - 1))


def build_P(key, n_envs, n_samples, D, n_targets, tau=0.5, pi=0.1):
    keys = jax.random.split(key, 2 * n_envs)
    Cs = []
    for e in range(n_envs):
        X = np.asarray(
            jax.random.normal(keys[2 * e], (n_samples, D), dtype=jnp.float32),
            dtype=np.float64,
        )
        Y = np.asarray(
            jax.random.normal(keys[2 * e + 1], (n_samples, n_targets), dtype=jnp.float32),
            dtype=np.float64,
        )
        cov = np.cov(X.T)                       # torch.cov(X.T)
        cross = _cross_cov(Y, X)                # (n_targets, D)
        Cs.append(cov)
        Cs.append(cross.T @ cross)
    if pi > 0.0:
        Cs = [C + pi * np.eye(D) for C in Cs]

    # fully_self_connected edges, quotient mode 'product': S = sum_i,j Cs[i] @ Cs[j]
    S = np.zeros((D, D))
    for Ci in Cs:
        for Cj in Cs:
            S = S + Ci @ Cj
    # project=True -> symmetrize and use eigh
    S = 0.5 * (S + S.T)
    Lambda, V = np.linalg.eigh(S)
    Lambda = Lambda.astype(np.float32)
    V = V.astype(np.float32)

    threshold = np.quantile(Lambda, tau)
    idx = np.where(Lambda <= threshold)[0]
    Vmatp = V.T[idx, :]
    P = Vmatp.T                                  # project=True branch
    return jnp.asarray(P, dtype=jnp.float32)


# ----------------------------------------------------------------------------
# Main
# ----------------------------------------------------------------------------
if __name__ == "__main__":
    key = jax.random.PRNGKey(0)
    k_fit, k_x, k_big = jax.random.split(key, 3)

    D = 32          # feature dimension (hidden)
    N = 16          # batch of inputs to the forward pass
    n_envs = 2
    n_samples = 64
    n_targets = 4
    tau = 0.5

    # Deterministic "fit" producing the projection buffer P (shape (D, K)).
    P = build_P(k_fit, n_envs, n_samples, D, n_targets, tau=tau, pi=0.1)

    # --- small forward (module-sized), f32 operands -------------------------
    x = jax.random.normal(k_x, (N, D), dtype=jnp.float32)
    out = jax.block_until_ready(metadiag_forward(x, P))
    ref = x @ P
    np.testing.assert_allclose(np.asarray(out), np.asarray(ref), rtol=1e-5, atol=1e-5)

    # --- larger forward exercising the N-tiling (multiple grid steps) -------
    N_big = 777
    x_big = jax.random.normal(k_big, (N_big, D), dtype=jnp.float32)
    out_big = jax.block_until_ready(metadiag_forward(x_big, P))
    ref_big = x_big @ P
    np.testing.assert_allclose(np.asarray(out_big), np.asarray(ref_big), rtol=1e-5, atol=1e-5)

    # --- bf16 operand path (native MXU dtype; f32 accumulation) -------------
    out_bf16 = jax.block_until_ready(
        metadiag_forward(x_big, P, compute_dtype=jnp.bfloat16)
    )
    ref_bf16 = jnp.dot(
        x_big.astype(jnp.bfloat16), P.astype(jnp.bfloat16),
        preferred_element_type=jnp.float32,
    )
    np.testing.assert_allclose(
        np.asarray(out_bf16), np.asarray(ref_bf16), rtol=2e-2, atol=2e-2
    )

    # TODO(synk): MatrixSquareRoot (scipy sqrtm) / eigh / quantile live in fit(),
    # not in forward(); they are reproduced as host-side numpy setup, not Pallas.
    print("KERNEL_OK")
</pallas_src>

<mosaic_0001>
module attributes {stable_mosaic.version = 11 : i64} {
  func.func @_metadiag_forward_kernel(%arg0: i32, %arg1: memref<16x32xf32, #tpu.memory_space<vmem>>, %arg2: memref<32x128xf32, #tpu.memory_space<vmem>>, %arg3: memref<16x128xf32, #tpu.memory_space<vmem>>) attributes {dimension_semantics = [#tpu.dimension_semantics<parallel>], iteration_bounds = array<i64: 1>, scalar_prefetch = 0 : i64, scratch_operands = 0 : i64, tpu.core_type = #tpu.core_type<tc>, window_params = [{transform_indices = @transform_0, window_bounds = array<i64: 16, 32>}, {pipeline_mode = #tpu.pipeline_mode<synchronous>, transform_indices = @transform_1, window_bounds = array<i64: 32, 128>}, {transform_indices = @transform_2, window_bounds = array<i64: 16, 128>}]} {
    %c0 = arith.constant 0 : index
    %c0_0 = arith.constant 0 : index
    %0 = vector.load %arg1[%c0, %c0_0] : memref<16x32xf32, #tpu.memory_space<vmem>>, vector<16x32xf32>
    %c0_1 = arith.constant 0 : index
    %c0_2 = arith.constant 0 : index
    %1 = vector.load %arg2[%c0_1, %c0_2] : memref<32x128xf32, #tpu.memory_space<vmem>>, vector<32x128xf32>
    %cst = arith.constant dense<0.000000e+00> : vector<16x128xf32>
    %2 = tpu.matmul %0, %1, %cst {dimension_numbers = #tpu.dot_dimension_numbers<[1], [0], [0], [1], [0, 0, 1, 1], [], []>} : vector<16x32xf32>, vector<32x128xf32>, vector<16x128xf32> -> vector<16x128xf32>
    %c0_3 = arith.constant 0 : index
    %c0_4 = arith.constant 0 : index
    %3 = vector.load %arg3[%c0_3, %c0_4] : memref<16x128xf32, #tpu.memory_space<vmem>>, vector<16x128xf32>
    tpu.vector_store %arg3[%c0_3, %c0_4], %2 {strides = array<i32>} : memref<16x128xf32, #tpu.memory_space<vmem>>, vector<16x128xf32>,
    return
  }
  func.func @transform_0(%arg0: i32) -> (i32, i32) {
    %c0_i32 = arith.constant 0 : i32
    %c0_i32_0 = arith.constant 0 : i32
    return %arg0, %c0_i32 : i32, i32
  }
  func.func @transform_1(%arg0: i32) -> (i32, i32) {
    %c0_i32 = arith.constant 0 : i32
    %c0_i32_0 = arith.constant 0 : i32
    %c0_i32_1 = arith.constant 0 : i32
    return %c0_i32, %c0_i32_0 : i32, i32
  }
  func.func @transform_2(%arg0: i32) -> (i32, i32) {
    %c0_i32 = arith.constant 0 : i32
    %c0_i32_0 = arith.constant 0 : i32
    return %arg0, %c0_i32 : i32, i32
  }
}

</mosaic_0001>

<llo_original>
// kernel: tpu_custom_call.1
$region0: #{tpu_custom_call.1}
  #allocation0 [shape = 'u32[]', space=smem, size = 0x4, offset = 0x4, fixed_abs, tag = 'smem constant byte address 0x4 - core index']
  #allocation1 [shape = 'u32[144,128]{1,0:T(1,128)}', space=vmem, size = 0x12000, scoped, tag = 'internal scratch']
  %s0 = inlined_call_operand.hbm [shape: f32[16,32], index: 0, kind: input, shape index: {}]
  %s1 = inlined_call_operand.hbm [shape: f32[32,128], index: 1, kind: input, shape index: {}]
  %s2 = inlined_call_operand.hbm [shape: f32[16,128], index: 2, kind: output, shape index: {}]
  %s3 = sld [smem:[#allocation0]]
  $region26: #{tpu_custom_call.1} parent=0
    _
  %s5 = ssub.s32 1, %s3
  %s6 = scalar_select 0, %s5, %s3
  $region1: #{tpu_custom_call.1} parent=0
    #allocation2 [shape = 'u8[8192]{0}', space=vmem, size = 0x2000, scoped, tag = 'input window, operand 0, single buffered']
    #allocation3 [shape = 's32[1]{0}', space=sflag, size = 0x4, scoped, tag = 'scoped memory for tpu_custom_call.1']
    #allocation4 [shape = 's32[1]{0}', space=sflag, size = 0x4, scoped, tag = 'scoped memory for tpu_custom_call.1']
    #allocation5 [shape = 'u8[16384]{0}', space=vmem, size = 0x4000, scoped, tag = 'input window, operand 1, single buffered']
    #allocation6 [shape = 's32[1]{0}', space=sflag, size = 0x4, scoped, tag = 'scoped memory for tpu_custom_call.1']
    #allocation7 [shape = 'u8[8192]{0}', space=vmem, size = 0x2000, scoped, tag = 'output window, operand 0, single buffered']
    %7 = vsyncpa [#allocation3], 0
    %8 = vsyncpa [#allocation6], 0
    %9 = vsyncpa [#allocation4], 0
    // Predicated region
    $region2: #{tpu_custom_call.1} parent=1 // pred_check
      _
    $region3: #{tpu_custom_call.1} parent=1 // pred_check_branch
      %11 = sbr.rel (0) target = $region5
    $region4: #{tpu_custom_call.1} parent=1 // pred_region
      %s13 = ssub.s32 256, 256
      %14 = vsyncadd [#allocation3], %s13
      %s15 = sshll.u32 [#allocation2], 4
      %s16 = int_to_ptr.vmem [resolvable:$true] %s15
      %21 = dma.hbm_to_vmem [thread:$0]  %s0, 256, %s16, [#allocation3], 128, 128, 8
    $region5: #{tpu_custom_call.1} parent=1 // pred_fallthru
      _
    // Predicated region
    $region6: #{tpu_custom_call.1} parent=1 // pred_check
      _
    $region7: #{tpu_custom_call.1} parent=1 // pred_check_branch
      %23 = sbr.rel (0) target = $region9
    $region8: #{tpu_custom_call.1} parent=1 // pred_region
      %s25 = ssub.s32 512, 512
      %26 = vsyncadd [#allocation6], %s25
      %s27 = sshll.u32 [#allocation5], 4
      %s28 = int_to_ptr.vmem [resolvable:$true] %s27
      %33 = dma.hbm_to_vmem [thread:$0]  %s1, 512, %s28, [#allocation6], 128, 128, 8
    $region9: #{tpu_custom_call.1} parent=1 // pred_fallthru
      _
    // Predicated region
    $region10: #{tpu_custom_call.1} parent=1 // pred_check
      _
    $region11: #{tpu_custom_call.1} parent=1 // pred_check_branch
      %35 = sbr.rel (0) target = $region13
    $region12: #{tpu_custom_call.1} parent=1 // pred_region
      %36 = dma.done [#allocation3], 256
    $region13: #{tpu_custom_call.1} parent=1 // pred_fallthru
      _
    // Predicated region
    $region14: #{tpu_custom_call.1} parent=1 // pred_check
      _
    $region15: #{tpu_custom_call.1} parent=1 // pred_check_branch
      %38 = sbr.rel (0) target = $region17
    $region16: #{tpu_custom_call.1} parent=1 // pred_region
      %39 = dma.done [#allocation6], 512
    $region17: #{tpu_custom_call.1} parent=1 // pred_fallthru
      _
    %v40 = vld [vmem:[#allocation2] sm:$0xff]
    %v41 = vld [vmem:[#allocation2 + $0x8] sm:$0xff]
    %v42 = vld [vmem:[#allocation5] sm:$0xff]
    %v43 = vld [vmem:[#allocation5 + $0x8] sm:$0xff]
    %v44 = vld [vmem:[#allocation5 + $0x10] sm:$0xff]
    %v45 = vld [vmem:[#allocation5 + $0x18] sm:$0xff]
    %vm46 = vcmask 261120
    %v48 = vsel %vm46, %v40, 0
    %v51 = vsel %vm46, %v41, 0
    %53 = vmatprep.subr.mxu0 0.0
    %54 = vmatpush1.msra.mxu0 %v42
    %55 = vmatprep.subr.mxu0 0.0
    %56 = vmatpush1.msra.mxu0 %v43
    %57 = vmatprep.subr.mxu0 0.0
    %58 = vmatpush1.msra.mxu0 %v44
    %59 = vmatprep.subr.mxu0 0.0
    %60 = vmatpush1.msra.mxu0 %v45
    %61 = vmatprep.subr.mxu0 0.0
    %62 = vmatpush1.msra.mxu0 0.0
    %63 = vmatprep.subr.mxu0 0.0
    %64 = vmatpush1.msra.mxu0 0.0
    %65 = vmatprep.subr.mxu0 0.0
    %66 = vmatpush1.msra.mxu0 0.0
    %67 = vmatprep.subr.mxu0 0.0
    %68 = vmatpush1.msra.mxu0 0.0
    %69 = vmatprep.subr.mxu0 0.0
    %70 = vmatpush1.msra.mxu0 0.0
    %71 = vmatprep.subr.mxu0 0.0
    %72 = vmatpush1.msra.mxu0 0.0
    %73 = vmatprep.subr.mxu0 0.0
    %74 = vmatpush1.msra.mxu0 0.0
    %75 = vmatprep.subr.mxu0 0.0
    %76 = vmatpush1.msra.mxu0 0.0
    %77 = vmatprep.subr.mxu0 0.0
    %78 = vmatpush1.msra.mxu0 0.0
    %79 = vmatprep.subr.mxu0 0.0
    %80 = vmatpush1.msra.mxu0 0.0
    %81 = vmatprep.subr.mxu0 0.0
    %82 = vmatpush1.msra.mxu0 0.0
    %83 = vmatprep.subr.mxu0 0.0
    %84 = vmatpush1.msra.mxu0 0.0
    %85 = vmatprep.subr.mxu0 0.0
    %86 = vmatpush1.msra.mxu0 0.0
    %87 = vmatprep.subr.mxu0 0.0
    %88 = vmatpush1.msra.mxu0 0.0
    %89 = vmatprep.subr.mxu0 0.0
    %90 = vmatpush1.msra.mxu0 0.0
    %91 = vmatprep.subr.mxu0 0.0
    %92 = vmatpush1.msra.mxu0 0.0
    %93 = vmatprep.subr.mxu0 0.0
    %94 = vmatpush1.msra.mxu0 0.0
    %95 = vmatprep.subr.mxu0 0.0
    %96 = vmatpush1.msra.mxu0 0.0
    %97 = vmatprep.subr.mxu0 0.0
    %98 = vmatpush1.msra.mxu0 0.0
    %99 = vmatprep.subr.mxu0 0.0
    %100 = vmatpush1.msra.mxu0 0.0
    %101 = vmatprep.subr.mxu0 0.0
    %102 = vmatpush1.msra.mxu0 0.0
    %103 = vmatprep.subr.mxu0 0.0
    %104 = vmatpush1.msra.mxu0 0.0
    %105 = vmatprep.subr.mxu0 0.0
    %106 = vmatpush1.msra.mxu0 0.0
    %107 = vmatprep.subr.mxu0 0.0
    %108 = vmatpush1.msra.mxu0 0.0
    %109 = vmatprep.subr.mxu0 0.0
    %110 = vmatpush1.msra.mxu0 0.0
    %111 = vmatprep.subr.mxu0 0.0
    %112 = vmatpush1.msra.mxu0 0.0
    %113 = vmatprep.subr.mxu0 0.0
    %114 = vmatpush1.msra.mxu0 0.0
    %115 = vmatprep.subr.mxu0 0.0
    %116 = vmatpush1.msra.mxu0 0.0
    %117 = vmatprep.mubr.f32.mxu0 0.0
    %118 = vmatmul.mubr.f32.gmra.mrb[0].mxu0 %v48
    %v119 = vpop.f32.mrb[0].mxu0
    %v120 = vadd.f32 0.0, %v119
    %v121 = vpop.f32.mrb[0].mxu0
    %122 = vmatprep.mubr.f32.mxu0 0.0
    %123 = vmatmul.mubr.f32.gmra.mrb[0].mxu0 %v51
    %v124 = vpop.f32.mrb[0].mxu0
    %v125 = vadd.f32 0.0, %v124
    %v126 = vpop.f32.mrb[0].mxu0
    %127 = vdwg.mxu0
    %128 = vst [vmem:[#allocation7] sm:$0xff] %v120
    %129 = vst [vmem:[#allocation7 + $0x8] sm:$0xff] %v125
    // Predicated region
    $region18: #{tpu_custom_call.1} parent=1 // pred_check
      _
    $region19: #{tpu_custom_call.1} parent=1 // pred_check_branch
      %131 = sbr.rel (0) target = $region21
    $region20: #{tpu_custom_call.1} parent=1 // pred_region
      %s133 = ssub.s32 256, 256
      %134 = vsyncadd [#allocation4], %s133
      %s135 = sshll.u32 [#allocation7], 4
      %s136 = int_to_ptr.vmem [resolvable:$true] %s135
      %141 = dma.vmem_to_hbm [thread:$0]  %s136, 256, %s2, [#allocation4], 128, 128, 8
    $region21: #{tpu_custom_call.1} parent=1 // pred_fallthru
      _
    // Predicated region
    $region22: #{tpu_custom_call.1} parent=1 // pred_check
      _
    $region23: #{tpu_custom_call.1} parent=1 // pred_check_branch
      %143 = sbr.rel (0) target = $region25
    $region24: #{tpu_custom_call.1} parent=1 // pred_region
      %144 = dma.done [#allocation4], 256
    $region25: #{tpu_custom_call.1} parent=1 // pred_fallthru
      _
    %145 = vsyncpa [#allocation3], 1
    %146 = vsyncpa [#allocation6], 1
    %147 = vsyncpa [#allocation4], 1

</llo_original>
